<compile_context>
chip_gen: v7x
topology: tpu7x:2x2x1
jax: 0.10.0
libtpu: 0.0.40
codegen_flags: <defaults>
</compile_context>

<pallas_src>
import numpy as np
import jax
import jax.numpy as jnp
from jax.experimental import pallas as pl
from jax.experimental.pallas import tpu as pltpu

_LANES = 128  # lane width used for all padded weight columns


def _round_up(n: int, m: int) -> int:
    return ((n + m - 1) // m) * m


def _cdiv(a: int, b: int) -> int:
    return -(-a // b)


# ----------------------------- Pallas kernel --------------------------------
def _make_actor_kernel(s_pad: int):
    W = _LANES
    b_off = s_pad + 3 * W  # first bias row inside the slab

    def kernel(state_ref, slab_ref, out_ref):
        s = state_ref[...]                                   # (bt, s_pad) compute dtype
        cdt = slab_ref.dtype

        # One fused matmul of the state against [w1 | integratorK | priorK].
        sp = jnp.dot(s, slab_ref[0:s_pad, :],
                     preferred_element_type=jnp.float32)     # (bt, 384) f32

        bias = slab_ref[b_off:b_off + 8, 0:W].astype(jnp.float32)  # (8, 128) f32

        # other_net: Linear -> tanh -> Linear -> tanh -> Linear -> tanh -> Linear.
        # Accumulation + tanh stay f32; matmul inputs use the slab's compute dtype.
        h = jnp.tanh(sp[:, 0:W] + bias[0:1])
        h = jnp.tanh(jnp.dot(h.astype(cdt), slab_ref[s_pad:s_pad + W, 0:W],
                             preferred_element_type=jnp.float32) + bias[1:2])
        h = jnp.tanh(jnp.dot(h.astype(cdt), slab_ref[s_pad + W:s_pad + 2 * W, 0:W],
                             preferred_element_type=jnp.float32) + bias[2:3])
        tmp1 = jnp.dot(h.astype(cdt), slab_ref[s_pad + 2 * W:s_pad + 3 * W, 0:W],
                       preferred_element_type=jnp.float32) + bias[3:4]

        tmp2 = sp[:, W:2 * W]          # integrator term (padded lanes are exactly 0)
        prior = sp[:, 2 * W:3 * W]     # prior term

        # Full-lane-width store (lane-dense, no masked vst); wrapper slices columns.
        out_ref[...] = (jnp.tanh(tmp1 + tmp2) + prior).astype(out_ref.dtype)

    return kernel


# --------------------------- parameter packing --------------------------------
def pack_params(p, state_dim, other_dim, mid_dim, action_dim, dtype=jnp.bfloat16):
    """Pack all 10 raw tensors into ONE (s_pad + 3*128 + 8, 384) zero-padded slab.

    Layout (rows x lanes):
      rows 0:s_pad          cols   0:128  -> w1   (other_dim x mid_dim)
                            cols 128:256  -> integratorK (rows other_dim:state_dim)
                            cols 256:384  -> priorK      (rows 0:state_dim)
      rows s_pad      +128  cols   0:128  -> w2
      rows s_pad+128  +128  cols   0:128  -> w3
      rows s_pad+256  +128  cols   0:128  -> w4
      rows s_pad+384  +8    cols   0:128  -> b1,b2,b3,b4 (one per row)
    """
    assert mid_dim <= _LANES and action_dim <= _LANES and other_dim <= state_dim
    W = _LANES
    s_pad = _round_up(state_dim, 16)          # 16-row alignment: valid for f32 & bf16
    rows = s_pad + 3 * W + 8

    slab = np.zeros((rows, 3 * W), np.float32)
    slab[:other_dim, :mid_dim] = np.asarray(p["w1"], np.float32)
    slab[other_dim:state_dim, W:W + action_dim] = np.asarray(p["integratorK"], np.float32)
    slab[:state_dim, 2 * W:2 * W + action_dim] = np.asarray(p["priorK"], np.float32)

    slab[s_pad:s_pad + mid_dim, :mid_dim] = np.asarray(p["w2"], np.float32)
    slab[s_pad + W:s_pad + W + mid_dim, :mid_dim] = np.asarray(p["w3"], np.float32)
    slab[s_pad + 2 * W:s_pad + 2 * W + mid_dim, :action_dim] = np.asarray(p["w4"], np.float32)

    b_off = s_pad + 3 * W
    slab[b_off + 0, :mid_dim] = np.asarray(p["b1"], np.float32).reshape(-1)
    slab[b_off + 1, :mid_dim] = np.asarray(p["b2"], np.float32).reshape(-1)
    slab[b_off + 2, :mid_dim] = np.asarray(p["b3"], np.float32).reshape(-1)
    slab[b_off + 3, :action_dim] = np.asarray(p["b4"], np.float32).reshape(-1)

    return jnp.asarray(slab, dtype)


# ------------------------------ batch tiling -----------------------------------
def _choose_batch_tile(B: int, cap: int) -> int:
    """Large tiles to amortize ~0.35us/step grid overhead; >=2 (ideally even)
    grid steps for B > 64 so v7x's two TensorCores both get work."""
    if B <= 64:
        return B                                   # single step, latency-bound case
    bt = min(cap, _round_up(_cdiv(B, 2), 32))
    steps = _cdiv(B, bt)
    if steps > 1 and steps % 2 == 1:
        bt = _round_up(_cdiv(B, steps + 1), 32)    # nudge to an even step count
    return bt


# ------------------------------- wrapper --------------------------------------
def actor_forward_pallas(state, slab, state_dim, action_dim, *, batch_tile_cap=2048):
    """state: (B, state_dim) float32.  Returns (B, action_dim) float32."""
    B = state.shape[0]
    W = _LANES
    s_pad = slab.shape[0] - 3 * W - 8
    cdt = slab.dtype

    # Cast (and, if needed, lane-pad) the state wrapper-side: keeps every in-kernel
    # slab slice tile-aligned and halves state HBM reads when cdt is bf16.
    s_in = state.astype(cdt)
    if state_dim < s_pad:
        s_in = jnp.pad(s_in, ((0, 0), (0, s_pad - state_dim)))

    bt = _choose_batch_tile(B, batch_tile_cap)
    steps = _cdiv(B, bt)

    flops = 2 * B * (s_pad * 3 * W + 3 * W * W)
    transcendentals = 4 * B * W
    bytes_accessed = (s_in.size * s_in.dtype.itemsize
                      + slab.size * slab.dtype.itemsize
                      + B * W * 4)

    out = pl.pallas_call(
        _make_actor_kernel(s_pad),
        out_shape=jax.ShapeDtypeStruct((B, W), jnp.float32),
        grid_spec=pltpu.PrefetchScalarGridSpec(
            num_scalar_prefetch=0,
            grid=(steps,),
            in_specs=[
                pl.BlockSpec((bt, s_pad), lambda i: (i, 0)),
                pl.BlockSpec(slab.shape, lambda i: (0, 0)),   # VMEM-resident weights
            ],
            out_specs=pl.BlockSpec((bt, W), lambda i: (i, 0)),
        ),
        compiler_params=pltpu.CompilerParams(
            dimension_semantics=("parallel",)),
        cost_estimate=pl.CostEstimate(
            flops=flops,
            transcendentals=transcendentals,
            bytes_accessed=bytes_accessed),
    )(s_in, slab)

    return out[:, :action_dim]


# --------------------------- parameter construction ---------------------------
def init_params(key, mid_dim, state_dim, action_dim, integrator_dim):
    other_dim = state_dim - integrator_dim
    ks = jax.random.split(key, 9)

    def linear(kw, kb, fan_in, fan_out):
        bound = 1.0 / np.sqrt(fan_in)
        w = jax.random.uniform(kw, (fan_in, fan_out), jnp.float32, -bound, bound)
        b = jax.random.uniform(kb, (1, fan_out), jnp.float32, -bound, bound)
        return w, b

    w1, b1 = linear(ks[0], ks[1], other_dim, mid_dim)
    w2, b2 = linear(ks[2], ks[3], mid_dim, mid_dim)
    w3, b3 = linear(ks[4], ks[5], mid_dim, mid_dim)
    # layer_norm(last, std=0.1): small weight scale, near-zero constant bias.
    w4, _ = linear(ks[6], ks[6], mid_dim, action_dim)
    w4 = w4 * 0.1
    b4 = jnp.full((1, action_dim), 1e-6, jnp.float32)

    priorK = jax.random.normal(ks[7], (state_dim, action_dim), jnp.float32) * 0.01
    integratorK = jax.random.normal(ks[8], (integrator_dim, action_dim),
                                    jnp.float32) * 0.01

    return {
        "w1": w1, "b1": b1, "w2": w2, "b2": b2,
        "w3": w3, "b3": b3, "w4": w4, "b4": b4,
        "priorK": priorK, "integratorK": integratorK,
    }, other_dim


# ------------------------------ pure-JAX reference ----------------------------
def actor_forward_ref(state, p, other_dim):
    other = state[:, :other_dim]
    integ = state[:, other_dim:]
    h = jnp.tanh(other @ p["w1"] + p["b1"])
    h = jnp.tanh(h @ p["w2"] + p["b2"])
    h = jnp.tanh(h @ p["w3"] + p["b3"])
    tmp1 = h @ p["w4"] + p["b4"]
    tmp2 = integ @ p["integratorK"]
    return jnp.tanh(tmp1 + tmp2) + state @ p["priorK"]


if __name__ == "__main__":
    # Small, module-consistent shapes.
    mid_dim = 32
    state_dim = 32
    action_dim = 8
    integrator_dim = 8

    key = jax.random.PRNGKey(0)
    pkey, skey1, skey2 = jax.random.split(key, 3)

    params, other_dim = init_params(pkey, mid_dim, state_dim, action_dim,
                                    integrator_dim)

    # --- exact-precision path (f32 slab), single grid step ---
    slab_f32 = pack_params(params, state_dim, other_dim, mid_dim, action_dim,
                           dtype=jnp.float32)
    state_small = jax.random.normal(skey1, (8, state_dim), jnp.float32)
    out = jax.block_until_ready(
        actor_forward_pallas(state_small, slab_f32, state_dim, action_dim))
    ref = actor_forward_ref(state_small, params, other_dim)
    np.testing.assert_allclose(np.asarray(out), np.asarray(ref),
                               rtol=1e-5, atol=1e-5)

    # --- bf16-MXU path (f32 accumulate / f32 tanh), multi-step parallel grid ---
    slab_bf16 = pack_params(params, state_dim, other_dim, mid_dim, action_dim,
                            dtype=jnp.bfloat16)
    state_big = jax.random.normal(skey2, (200, state_dim), jnp.float32)
    out_b = jax.block_until_ready(
        actor_forward_pallas(state_big, slab_bf16, state_dim, action_dim))
    ref_b = actor_forward_ref(state_big, params, other_dim)
    np.testing.assert_allclose(np.asarray(out_b), np.asarray(ref_b),
                               rtol=2e-2, atol=2e-2)

    print("KERNEL_OK")
</pallas_src>

<mosaic_0001>
module attributes {stable_mosaic.version = 11 : i64} {
  func.func @kernel(%arg0: i32, %arg1: memref<8x32xf32, #tpu.memory_space<vmem>>, %arg2: memref<424x384xf32, #tpu.memory_space<vmem>>, %arg3: memref<8x128xf32, #tpu.memory_space<vmem>>) attributes {dimension_semantics = [#tpu.dimension_semantics<parallel>], iteration_bounds = array<i64: 1>, scalar_prefetch = 0 : i64, scratch_operands = 0 : i64, tpu.core_type = #tpu.core_type<tc>, window_params = [{transform_indices = @transform_0, window_bounds = array<i64: 8, 32>}, {pipeline_mode = #tpu.pipeline_mode<synchronous>, transform_indices = @transform_1, window_bounds = array<i64: 424, 384>}, {transform_indices = @transform_2, window_bounds = array<i64: 8, 128>}]} {
    %c0 = arith.constant 0 : index
    %c0_0 = arith.constant 0 : index
    %0 = vector.load %arg1[%c0, %c0_0] : memref<8x32xf32, #tpu.memory_space<vmem>>, vector<8x32xf32>
    %c0_1 = arith.constant 0 : index
    %c0_2 = arith.constant 0 : index
    %1 = vector.load %arg2[%c0_1, %c0_2] : memref<424x384xf32, #tpu.memory_space<vmem>>, vector<32x384xf32>
    %cst = arith.constant dense<0.000000e+00> : vector<8x384xf32>
    %2 = tpu.matmul %0, %1, %cst {dimension_numbers = #tpu.dot_dimension_numbers<[1], [0], [0], [1], [0, 0, 1, 1], [], []>} : vector<8x32xf32>, vector<32x384xf32>, vector<8x384xf32> -> vector<8x384xf32>
    %c416 = arith.constant 416 : index
    %c0_3 = arith.constant 0 : index
    %3 = vector.load %arg2[%c416, %c0_3] : memref<424x384xf32, #tpu.memory_space<vmem>>, vector<8x128xf32>
    %4 = vector.extract_strided_slice %2 {offsets = [0, 0], sizes = [8, 128], strides = [1, 1]} : vector<8x384xf32> to vector<8x128xf32>
    %5 = vector.extract_strided_slice %3 {offsets = [0, 0], sizes = [1, 128], strides = [1, 1]} : vector<8x128xf32> to vector<1x128xf32>
    %6 = vector.broadcast %5 : vector<1x128xf32> to vector<8x128xf32>
    %7 = arith.addf %4, %6 : vector<8x128xf32>
    %8 = math.tanh %7 : vector<8x128xf32>
    %c32 = arith.constant 32 : index
    %c0_4 = arith.constant 0 : index
    %9 = vector.load %arg2[%c32, %c0_4] : memref<424x384xf32, #tpu.memory_space<vmem>>, vector<128x128xf32>
    %cst_5 = arith.constant dense<0.000000e+00> : vector<8x128xf32>
    %10 = tpu.matmul %8, %9, %cst_5 {dimension_numbers = #tpu.dot_dimension_numbers<[1], [0], [0], [1], [0, 0, 1, 1], [], []>} : vector<8x128xf32>, vector<128x128xf32>, vector<8x128xf32> -> vector<8x128xf32>
    %11 = vector.extract_strided_slice %3 {offsets = [1, 0], sizes = [1, 128], strides = [1, 1]} : vector<8x128xf32> to vector<1x128xf32>
    %12 = vector.broadcast %11 : vector<1x128xf32> to vector<8x128xf32>
    %13 = arith.addf %10, %12 : vector<8x128xf32>
    %14 = math.tanh %13 : vector<8x128xf32>
    %c160 = arith.constant 160 : index
    %c0_6 = arith.constant 0 : index
    %15 = vector.load %arg2[%c160, %c0_6] : memref<424x384xf32, #tpu.memory_space<vmem>>, vector<128x128xf32>
    %cst_7 = arith.constant dense<0.000000e+00> : vector<8x128xf32>
    %16 = tpu.matmul %14, %15, %cst_7 {dimension_numbers = #tpu.dot_dimension_numbers<[1], [0], [0], [1], [0, 0, 1, 1], [], []>} : vector<8x128xf32>, vector<128x128xf32>, vector<8x128xf32> -> vector<8x128xf32>
    %17 = vector.extract_strided_slice %3 {offsets = [2, 0], sizes = [1, 128], strides = [1, 1]} : vector<8x128xf32> to vector<1x128xf32>
    %18 = vector.broadcast %17 : vector<1x128xf32> to vector<8x128xf32>
    %19 = arith.addf %16, %18 : vector<8x128xf32>
    %20 = math.tanh %19 : vector<8x128xf32>
    %c288 = arith.constant 288 : index
    %c0_8 = arith.constant 0 : index
    %21 = vector.load %arg2[%c288, %c0_8] : memref<424x384xf32, #tpu.memory_space<vmem>>, vector<128x128xf32>
    %cst_9 = arith.constant dense<0.000000e+00> : vector<8x128xf32>
    %22 = tpu.matmul %20, %21, %cst_9 {dimension_numbers = #tpu.dot_dimension_numbers<[1], [0], [0], [1], [0, 0, 1, 1], [], []>} : vector<8x128xf32>, vector<128x128xf32>, vector<8x128xf32> -> vector<8x128xf32>
    %23 = vector.extract_strided_slice %3 {offsets = [3, 0], sizes = [1, 128], strides = [1, 1]} : vector<8x128xf32> to vector<1x128xf32>
    %24 = vector.broadcast %23 : vector<1x128xf32> to vector<8x128xf32>
    %25 = arith.addf %22, %24 : vector<8x128xf32>
    %26 = vector.extract_strided_slice %2 {offsets = [0, 128], sizes = [8, 128], strides = [1, 1]} : vector<8x384xf32> to vector<8x128xf32>
    %27 = vector.extract_strided_slice %2 {offsets = [0, 256], sizes = [8, 128], strides = [1, 1]} : vector<8x384xf32> to vector<8x128xf32>
    %28 = arith.addf %25, %26 : vector<8x128xf32>
    %29 = math.tanh %28 : vector<8x128xf32>
    %30 = arith.addf %29, %27 : vector<8x128xf32>
    %c0_10 = arith.constant 0 : index
    %c0_11 = arith.constant 0 : index
    %31 = vector.load %arg3[%c0_10, %c0_11] : memref<8x128xf32, #tpu.memory_space<vmem>>, vector<8x128xf32>
    tpu.vector_store %arg3[%c0_10, %c0_11], %30 {strides = array<i32>} : memref<8x128xf32, #tpu.memory_space<vmem>>, vector<8x128xf32>,
    return
  }
  func.func @transform_0(%arg0: i32) -> (i32, i32) {
    %c0_i32 = arith.constant 0 : i32
    %c0_i32_0 = arith.constant 0 : i32
    return %arg0, %c0_i32 : i32, i32
  }
  func.func @transform_1(%arg0: i32) -> (i32, i32) {
    %c0_i32 = arith.constant 0 : i32
    %c0_i32_0 = arith.constant 0 : i32
    %c0_i32_1 = arith.constant 0 : i32
    return %c0_i32, %c0_i32_0 : i32, i32
  }
  func.func @transform_2(%arg0: i32) -> (i32, i32) {
    %c0_i32 = arith.constant 0 : i32
    %c0_i32_0 = arith.constant 0 : i32
    return %arg0, %c0_i32 : i32, i32
  }
}

</mosaic_0001>

<llo_original>
// kernel: tpu_custom_call.1
$region0: #{tpu_custom_call.1}
  #allocation0 [shape = 'u32[]', space=smem, size = 0x4, offset = 0x4, fixed_abs, tag = 'smem constant byte address 0x4 - core index']
  #allocation1 [shape = 'u32[144,128]{1,0:T(1,128)}', space=vmem, size = 0x12000, scoped, tag = 'internal scratch']
  %s0 = inlined_call_operand.hbm [shape: f32[8,32], index: 0, kind: input, shape index: {}]
  %s1 = inlined_call_operand.hbm [shape: f32[424,384], index: 1, kind: input, shape index: {}]
  %s2 = inlined_call_operand.hbm [shape: f32[8,128], index: 2, kind: output, shape index: {}]
  %s3 = sld [smem:[#allocation0]]
  $region26: #{tpu_custom_call.1} parent=0
    _
  %s5 = ssub.s32 1, %s3
  %s6 = scalar_select 0, %s5, %s3
  $region1: #{tpu_custom_call.1} parent=0
    #allocation2 [shape = 'u8[4096]{0}', space=vmem, size = 0x1000, scoped, tag = 'input window, operand 0, single buffered']
    #allocation3 [shape = 's32[1]{0}', space=sflag, size = 0x4, scoped, tag = 'scoped memory for tpu_custom_call.1']
    #allocation4 [shape = 's32[1]{0}', space=sflag, size = 0x4, scoped, tag = 'scoped memory for tpu_custom_call.1']
    #allocation5 [shape = 'u8[651264]{0}', space=vmem, size = 0x9f000, scoped, tag = 'input window, operand 1, single buffered']
    #allocation6 [shape = 's32[1]{0}', space=sflag, size = 0x4, scoped, tag = 'scoped memory for tpu_custom_call.1']
    #allocation7 [shape = 'u8[4096]{0}', space=vmem, size = 0x1000, scoped, tag = 'output window, operand 0, single buffered']
    %7 = vsyncpa [#allocation3], 0
    %8 = vsyncpa [#allocation6], 0
    %9 = vsyncpa [#allocation4], 0
    // Predicated region
    $region2: #{tpu_custom_call.1} parent=1 // pred_check
      _
    $region3: #{tpu_custom_call.1} parent=1 // pred_check_branch
      %11 = sbr.rel (0) target = $region5
    $region4: #{tpu_custom_call.1} parent=1 // pred_region
      %s13 = ssub.s32 128, 128
      %14 = vsyncadd [#allocation3], %s13
      %s16 = sshll.u32 [#allocation2], 4
      %s17 = int_to_ptr.vmem [resolvable:$true] %s16
      %19 = dma.hbm_to_vmem [thread:$0]  %s0, 128, %s17, [#allocation3]
    $region5: #{tpu_custom_call.1} parent=1 // pred_fallthru
      _
    // Predicated region
    $region6: #{tpu_custom_call.1} parent=1 // pred_check
      _
    $region7: #{tpu_custom_call.1} parent=1 // pred_check_branch
      %21 = sbr.rel (0) target = $region9
    $region8: #{tpu_custom_call.1} parent=1 // pred_region
      %s23 = ssub.s32 20352, 20352
      %24 = vsyncadd [#allocation6], %s23
      %s25 = sshll.u32 [#allocation5], 4
      %s26 = int_to_ptr.vmem [resolvable:$true] %s25
      %31 = dma.hbm_to_vmem [thread:$0]  %s1, 20352, %s26, [#allocation6], 384, 384, 24
    $region9: #{tpu_custom_call.1} parent=1 // pred_fallthru
      _
    // Predicated region
    $region10: #{tpu_custom_call.1} parent=1 // pred_check
      _
    $region11: #{tpu_custom_call.1} parent=1 // pred_check_branch
      %33 = sbr.rel (0) target = $region13
    $region12: #{tpu_custom_call.1} parent=1 // pred_region
      %34 = dma.done [#allocation3], 128
    $region13: #{tpu_custom_call.1} parent=1 // pred_fallthru
      _
    // Predicated region
    $region14: #{tpu_custom_call.1} parent=1 // pred_check
      _
    $region15: #{tpu_custom_call.1} parent=1 // pred_check_branch
      %36 = sbr.rel (0) target = $region17
    $region16: #{tpu_custom_call.1} parent=1 // pred_region
      %37 = dma.done [#allocation6], 20352
    $region17: #{tpu_custom_call.1} parent=1 // pred_fallthru
      _
    %v38 = vld [vmem:[#allocation2] sm:$0xff]
    %v39 = vld [vmem:[#allocation5] sm:$0xff]
    %v40 = vld [vmem:[#allocation5 + $0x8] sm:$0xff]
    %v41 = vld [vmem:[#allocation5 + $0x10] sm:$0xff]
    %v42 = vld [vmem:[#allocation5 + $0x18] sm:$0xff]
    %v43 = vld [vmem:[#allocation5 + $0x20] sm:$0xff]
    %v44 = vld [vmem:[#allocation5 + $0x28] sm:$0xff]
    %v45 = vld [vmem:[#allocation5 + $0x30] sm:$0xff]
    %v46 = vld [vmem:[#allocation5 + $0x38] sm:$0xff]
    %v47 = vld [vmem:[#allocation5 + $0x40] sm:$0xff]
    %v48 = vld [vmem:[#allocation5 + $0x48] sm:$0xff]
    %v49 = vld [vmem:[#allocation5 + $0x50] sm:$0xff]
    %v50 = vld [vmem:[#allocation5 + $0x58] sm:$0xff]
    %vm51 = vcmask 261120
    %v53 = vsel %vm51, %v38, 0
    %55 = vmatprep.subr.mxu0 %v40
    %56 = vmatpush1.msra.mxu0 %v39
    %57 = vmatprep.subr.mxu0 %v43
    %58 = vmatpush1.msra.mxu0 %v42
    %59 = vmatprep.subr.mxu0 %v46
    %60 = vmatpush1.msra.mxu0 %v45
    %61 = vmatprep.subr.mxu0 %v49
    %62 = vmatpush1.msra.mxu0 %v48
    %63 = vmatprep.subr.mxu0 0.0
    %64 = vmatpush1.msra.mxu0 0.0
    %65 = vmatprep.subr.mxu0 0.0
    %66 = vmatpush1.msra.mxu0 0.0
    %67 = vmatprep.subr.mxu0 0.0
    %68 = vmatpush1.msra.mxu0 0.0
    %69 = vmatprep.subr.mxu0 0.0
    %70 = vmatpush1.msra.mxu0 0.0
    %71 = vmatprep.subr.mxu0 0.0
    %72 = vmatpush1.msra.mxu0 0.0
    %73 = vmatprep.subr.mxu0 0.0
    %74 = vmatpush1.msra.mxu0 0.0
    %75 = vmatprep.subr.mxu0 0.0
    %76 = vmatpush1.msra.mxu0 0.0
    %77 = vmatprep.subr.mxu0 0.0
    %78 = vmatpush1.msra.mxu0 0.0
    %79 = vmatprep.subr.mxu0 0.0
    %80 = vmatpush1.msra.mxu0 0.0
    %81 = vmatprep.subr.mxu0 0.0
    %82 = vmatpush1.msra.mxu0 0.0
    %83 = vmatprep.subr.mxu0 0.0
    %84 = vmatpush1.msra.mxu0 0.0
    %85 = vmatprep.subr.mxu0 0.0
    %86 = vmatpush1.msra.mxu0 0.0
    %87 = vmatprep.subr.mxu0 0.0
    %88 = vmatpush1.msra.mxu0 0.0
    %89 = vmatprep.subr.mxu0 0.0
    %90 = vmatpush1.msra.mxu0 0.0
    %91 = vmatprep.subr.mxu0 0.0
    %92 = vmatpush1.msra.mxu0 0.0
    %93 = vmatprep.subr.mxu0 0.0
    %94 = vmatpush1.msra.mxu0 0.0
    %95 = vmatprep.subr.mxu0 0.0
    %96 = vmatpush1.msra.mxu0 0.0
    %97 = vmatprep.subr.mxu0 0.0
    %98 = vmatpush1.msra.mxu0 0.0
    %99 = vmatprep.subr.mxu0 0.0
    %100 = vmatpush1.msra.mxu0 0.0
    %101 = vmatprep.subr.mxu0 0.0
    %102 = vmatpush1.msra.mxu0 0.0
    %103 = vmatprep.subr.mxu0 0.0
    %104 = vmatpush1.msra.mxu0 0.0
    %105 = vmatprep.subr.mxu0 0.0
    %106 = vmatpush1.msra.mxu0 0.0
    %107 = vmatprep.subr.mxu0 0.0
    %108 = vmatpush1.msra.mxu0 0.0
    %109 = vmatprep.subr.mxu0 0.0
    %110 = vmatpush1.msra.mxu0 0.0
    %111 = vmatprep.subr.mxu0 0.0
    %112 = vmatpush1.msra.mxu0 0.0
    %113 = vmatprep.subr.mxu0 0.0
    %114 = vmatpush1.msra.mxu0 0.0
    %115 = vmatprep.subr.mxu0 0.0
    %116 = vmatpush1.msra.mxu0 0.0
    %117 = vmatprep.subr.mxu0 0.0
    %118 = vmatpush1.msra.mxu0 0.0
    %119 = vmatprep.mubr.f32.mxu0 0.0
    %120 = vmatmul.mubr.f32.gmra.mrb[0].mxu0 %v53
    %v121 = vpop.f32.mrb[0].mxu0
    %v122 = vadd.f32 0.0, %v121
    %v123 = vpop.f32.mrb[0].mxu0
    %v124 = vadd.f32 0.0, %v123
    %125 = vdwg.mxu0
    %126 = vmatprep.subr.mxu0 0.0
    %127 = vmatpush1.msra.mxu0 %v41
    %128 = vmatprep.subr.mxu0 0.0
    %129 = vmatpush1.msra.mxu0 %v44
    %130 = vmatprep.subr.mxu0 0.0
    %131 = vmatpush1.msra.mxu0 %v47
    %132 = vmatprep.subr.mxu0 0.0
    %133 = vmatpush1.msra.mxu0 %v50
    %134 = vmatprep.subr.mxu0 0.0
    %135 = vmatpush1.msra.mxu0 0.0
    %136 = vmatprep.subr.mxu0 0.0
    %137 = vmatpush1.msra.mxu0 0.0
    %138 = vmatprep.subr.mxu0 0.0
    %139 = vmatpush1.msra.mxu0 0.0
    %140 = vmatprep.subr.mxu0 0.0
    %141 = vmatpush1.msra.mxu0 0.0
    %142 = vmatprep.subr.mxu0 0.0
    %143 = vmatpush1.msra.mxu0 0.0
    %144 = vmatprep.subr.mxu0 0.0
    %145 = vmatpush1.msra.mxu0 0.0
    %146 = vmatprep.subr.mxu0 0.0
    %147 = vmatpush1.msra.mxu0 0.0
    %148 = vmatprep.subr.mxu0 0.0
    %149 = vmatpush1.msra.mxu0 0.0
    %150 = vmatprep.subr.mxu0 0.0
    %151 = vmatpush1.msra.mxu0 0.0
    %152 = vmatprep.subr.mxu0 0.0
    %153 = vmatpush1.msra.mxu0 0.0
    %154 = vmatprep.subr.mxu0 0.0
    %155 = vmatpush1.msra.mxu0 0.0
    %156 = vmatprep.subr.mxu0 0.0
    %157 = vmatpush1.msra.mxu0 0.0
    %158 = vmatprep.subr.mxu0 0.0
    %159 = vmatpush1.msra.mxu0 0.0
    %160 = vmatprep.subr.mxu0 0.0
    %161 = vmatpush1.msra.mxu0 0.0
    %162 = vmatprep.subr.mxu0 0.0
    %163 = vmatpush1.msra.mxu0 0.0
    %164 = vmatprep.subr.mxu0 0.0
    %165 = vmatpush1.msra.mxu0 0.0
    %166 = vmatprep.subr.mxu0 0.0
    %167 = vmatpush1.msra.mxu0 0.0
    %168 = vmatprep.subr.mxu0 0.0
    %169 = vmatpush1.msra.mxu0 0.0
    %170 = vmatprep.subr.mxu0 0.0
    %171 = vmatpush1.msra.mxu0 0.0
    %172 = vmatprep.subr.mxu0 0.0
    %173 = vmatpush1.msra.mxu0 0.0
    %174 = vmatprep.subr.mxu0 0.0
    %175 = vmatpush1.msra.mxu0 0.0
    %176 = vmatprep.subr.mxu0 0.0
    %177 = vmatpush1.msra.mxu0 0.0
    %178 = vmatprep.subr.mxu0 0.0
    %179 = vmatpush1.msra.mxu0 0.0
    %180 = vmatprep.subr.mxu0 0.0
    %181 = vmatpush1.msra.mxu0 0.0
    %182 = vmatprep.subr.mxu0 0.0
    %183 = vmatpush1.msra.mxu0 0.0
    %184 = vmatprep.subr.mxu0 0.0
    %185 = vmatpush1.msra.mxu0 0.0
    %186 = vmatprep.subr.mxu0 0.0
    %187 = vmatpush1.msra.mxu0 0.0
    %188 = vmatprep.subr.mxu0 0.0
    %189 = vmatpush1.msra.mxu0 0.0
    %190 = vmatprep.mubr.f32.mxu0 0.0
    %191 = vmatmul.mubr.f32.gmra.mrb[0].mxu0 %v53
    %v192 = vpop.f32.mrb[0].mxu0
    %v193 = vadd.f32 0.0, %v192
    %v194 = vpop.f32.mrb[0].mxu0
    %195 = vdwg.mxu0
    %v196 = vld [vmem:[#allocation5 + $0x4e0] sm:$0xff]
    %v197 = vlaneseq
    %v198 = vshrl.u32 %v197, 7
    %v199 = vsub.s32 0, %v198
    %v200 = vrot.slane %v196, %v199
    %v201 = vadd.f32 %v122, %v200
    %v202 = vtanh.pop %v201
    %v203 = vld [vmem:[#allocation5 + $0x60] sm:$0xff]
    %v204 = vld [vmem:[#allocation5 + $0x78] sm:$0xff]
    %v205 = vld [vmem:[#allocation5 + $0x90] sm:$0xff]
    %v206 = vld [vmem:[#allocation5 + $0xa8] sm:$0xff]
    %v207 = vld [vmem:[#allocation5 + $0xc0] sm:$0xff]
    %v208 = vld [vmem:[#allocation5 + $0xd8] sm:$0xff]
    %v209 = vld [vmem:[#allocation5 + $0xf0] sm:$0xff]
    %v210 = vld [vmem:[#allocation5 + $0x108] sm:$0xff]
    %v211 = vld [vmem:[#allocation5 + $0x120] sm:$0xff]
    %v212 = vld [vmem:[#allocation5 + $0x138] sm:$0xff]
    %v213 = vld [vmem:[#allocation5 + $0x150] sm:$0xff]
    %v214 = vld [vmem:[#allocation5 + $0x168] sm:$0xff]
    %v215 = vld [vmem:[#allocation5 + $0x180] sm:$0xff]
    %v216 = vld [vmem:[#allocation5 + $0x198] sm:$0xff]
    %v217 = vld [vmem:[#allocation5 + $0x1b0] sm:$0xff]
    %v218 = vld [vmem:[#allocation5 + $0x1c8] sm:$0xff]
    %v219 = vlaneseq
    %v220 = vshrl.u32 %v219, 7
    %v221 = vsub.s32 1, %v220
    %v222 = vrot.slane %v196, %v221
    %223 = vmatprep.subr.mxu0 0.0
    %224 = vmatpush1.msra.mxu0 %v203
    %225 = vmatprep.subr.mxu0 0.0
    %226 = vmatpush1.msra.mxu0 %v204
    %227 = vmatprep.subr.mxu0 0.0
    %228 = vmatpush1.msra.mxu0 %v205
    %229 = vmatprep.subr.mxu0 0.0
    %230 = vmatpush1.msra.mxu0 %v206
    %231 = vmatprep.subr.mxu0 0.0
    %232 = vmatpush1.msra.mxu0 %v207
    %233 = vmatprep.subr.mxu0 0.0
    %234 = vmatpush1.msra.mxu0 %v208
    %235 = vmatprep.subr.mxu0 0.0
    %236 = vmatpush1.msra.mxu0 %v209
    %237 = vmatprep.subr.mxu0 0.0
    %238 = vmatpush1.msra.mxu0 %v210
    %239 = vmatprep.subr.mxu0 0.0
    %240 = vmatpush1.msra.mxu0 %v211
    %241 = vmatprep.subr.mxu0 0.0
    %242 = vmatpush1.msra.mxu0 %v212
    %243 = vmatprep.subr.mxu0 0.0
    %244 = vmatpush1.msra.mxu0 %v213
    %245 = vmatprep.subr.mxu0 0.0
    %246 = vmatpush1.msra.mxu0 %v214
    %247 = vmatprep.subr.mxu0 0.0
    %248 = vmatpush1.msra.mxu0 %v215
    %249 = vmatprep.subr.mxu0 0.0
    %250 = vmatpush1.msra.mxu0 %v216
    %251 = vmatprep.subr.mxu0 0.0
    %252 = vmatpush1.msra.mxu0 %v217
    %253 = vmatprep.subr.mxu0 0.0
    %254 = vmatpush1.msra.mxu0 %v218
    %255 = vmatprep.subr.mxu0 0.0
    %256 = vmatpush1.msra.mxu0 0.0
    %257 = vmatprep.subr.mxu0 0.0
    %258 = vmatpush1.msra.mxu0 0.0
    %259 = vmatprep.subr.mxu0 0.0
    %260 = vmatpush1.msra.mxu0 0.0
    %261 = vmatprep.subr.mxu0 0.0
    %262 = vmatpush1.msra.mxu0 0.0
    %263 = vmatprep.subr.mxu0 0.0
    %264 = vmatpush1.msra.mxu0 0.0
    %265 = vmatprep.subr.mxu0 0.0
    %266 = vmatpush1.msra.mxu0 0.0
    %267 = vmatprep.subr.mxu0 0.0
    %268 = vmatpush1.msra.mxu0 0.0
    %269 = vmatprep.subr.mxu0 0.0
    %270 = vmatpush1.msra.mxu0 0.0
    %271 = vmatprep.subr.mxu0 0.0
    %272 = vmatpush1.msra.mxu0 0.0
    %273 = vmatprep.subr.mxu0 0.0
    %274 = vmatpush1.msra.mxu0 0.0
    %275 = vmatprep.subr.mxu0 0.0
    %276 = vmatpush1.msra.mxu0 0.0
    %277 = vmatprep.subr.mxu0 0.0
    %278 = vmatpush1.msra.mxu0 0.0
    %279 = vmatprep.subr.mxu0 0.0
    %280 = vmatpush1.msra.mxu0 0.0
    %281 = vmatprep.subr.mxu0 0.0
    %282 = vmatpush1.msra.mxu0 0.0
    %283 = vmatprep.subr.mxu0 0.0
    %284 = vmatpush1.msra.mxu0 0.0
    %285 = vmatprep.subr.mxu0 0.0
    %286 = vmatpush1.msra.mxu0 0.0
    %287 = vmatprep.mubr.f32.mxu0 0.0
    %288 = vmatmul.mubr.f32.gmra.mrb[0].mxu0 %v202
    %v289 = vpop.f32.mrb[0].mxu0
    %v290 = vadd.f32 %v222, %v289
    %v291 = vpop.f32.mrb[0].mxu0
    %292 = vdwg.mxu0
    %v293 = vtanh.pop %v290
    %v294 = vld [vmem:[#allocation5 + $0x1e0] sm:$0xff]
    %v295 = vld [vmem:[#allocation5 + $0x1f8] sm:$0xff]
    %v296 = vld [vmem:[#allocation5 + $0x210] sm:$0xff]
    %v297 = vld [vmem:[#allocation5 + $0x228] sm:$0xff]
    %v298 = vld [vmem:[#allocation5 + $0x240] sm:$0xff]
    %v299 = vld [vmem:[#allocation5 + $0x258] sm:$0xff]
    %v300 = vld [vmem:[#allocation5 + $0x270] sm:$0xff]
    %v301 = vld [vmem:[#allocation5 + $0x288] sm:$0xff]
    %v302 = vld [vmem:[#allocation5 + $0x2a0] sm:$0xff]
    %v303 = vld [vmem:[#allocation5 + $0x2b8] sm:$0xff]
    %v304 = vld [vmem:[#allocation5 + $0x2d0] sm:$0xff]
    %v305 = vld [vmem:[#allocation5 + $0x2e8] sm:$0xff]
    %v306 = vld [vmem:[#allocation5 + $0x300] sm:$0xff]
    %v307 = vld [vmem:[#allocation5 + $0x318] sm:$0xff]
    %v308 = vld [vmem:[#allocation5 + $0x330] sm:$0xff]
    %v309 = vld [vmem:[#allocation5 + $0x348] sm:$0xff]
    %v310 = vlaneseq
    %v311 = vshrl.u32 %v310, 7
    %v312 = vsub.s32 2, %v311
    %v313 = vrot.slane %v196, %v312
    %314 = vmatprep.subr.mxu0 0.0
    %315 = vmatpush1.msra.mxu0 %v294
    %316 = vmatprep.subr.mxu0 0.0
    %317 = vmatpush1.msra.mxu0 %v295
    %318 = vmatprep.subr.mxu0 0.0
    %319 = vmatpush1.msra.mxu0 %v296
    %320 = vmatprep.subr.mxu0 0.0
    %321 = vmatpush1.msra.mxu0 %v297
    %322 = vmatprep.subr.mxu0 0.0
    %323 = vmatpush1.msra.mxu0 %v298
    %324 = vmatprep.subr.mxu0 0.0
    %325 = vmatpush1.msra.mxu0 %v299
    %326 = vmatprep.subr.mxu0 0.0
    %327 = vmatpush1.msra.mxu0 %v300
    %328 = vmatprep.subr.mxu0 0.0
    %329 = vmatpush1.msra.mxu0 %v301
    %330 = vmatprep.subr.mxu0 0.0
    %331 = vmatpush1.msra.mxu0 %v302
    %332 = vmatprep.subr.mxu0 0.0
    %333 = vmatpush1.msra.mxu0 %v303
    %334 = vmatprep.subr.mxu0 0.0
    %335 = vmatpush1.msra.mxu0 %v304
    %336 = vmatprep.subr.mxu0 0.0
    %337 = vmatpush1.msra.mxu0 %v305
    %338 = vmatprep.subr.mxu0 0.0
    %339 = vmatpush1.msra.mxu0 %v306
    %340 = vmatprep.subr.mxu0 0.0
    %341 = vmatpush1.msra.mxu0 %v307
    %342 = vmatprep.subr.mxu0 0.0
    %343 = vmatpush1.msra.mxu0 %v308
    %344 = vmatprep.subr.mxu0 0.0
    %345 = vmatpush1.msra.mxu0 %v309
    %346 = vmatprep.subr.mxu0 0.0
    %347 = vmatpush1.msra.mxu0 0.0
    %348 = vmatprep.subr.mxu0 0.0
    %349 = vmatpush1.msra.mxu0 0.0
    %350 = vmatprep.subr.mxu0 0.0
    %351 = vmatpush1.msra.mxu0 0.0
    %352 = vmatprep.subr.mxu0 0.0
    %353 = vmatpush1.msra.mxu0 0.0
    %354 = vmatprep.subr.mxu0 0.0
    %355 = vmatpush1.msra.mxu0 0.0
    %356 = vmatprep.subr.mxu0 0.0
    %357 = vmatpush1.msra.mxu0 0.0
    %358 = vmatprep.subr.mxu0 0.0
    %359 = vmatpush1.msra.mxu0 0.0
    %360 = vmatprep.subr.mxu0 0.0
    %361 = vmatpush1.msra.mxu0 0.0
    %362 = vmatprep.subr.mxu0 0.0
    %363 = vmatpush1.msra.mxu0 0.0
    %364 = vmatprep.subr.mxu0 0.0
    %365 = vmatpush1.msra.mxu0 0.0
    %366 = vmatprep.subr.mxu0 0.0
    %367 = vmatpush1.msra.mxu0 0.0
    %368 = vmatprep.subr.mxu0 0.0
    %369 = vmatpush1.msra.mxu0 0.0
    %370 = vmatprep.subr.mxu0 0.0
    %371 = vmatpush1.msra.mxu0 0.0
    %372 = vmatprep.subr.mxu0 0.0
    %373 = vmatpush1.msra.mxu0 0.0
    %374 = vmatprep.subr.mxu0 0.0
    %375 = vmatpush1.msra.mxu0 0.0
    %376 = vmatprep.subr.mxu0 0.0
    %377 = vmatpush1.msra.mxu0 0.0
    %378 = vmatprep.mubr.f32.mxu0 0.0
    %379 = vmatmul.mubr.f32.gmra.mrb[0].mxu0 %v293
    %v380 = vpop.f32.mrb[0].mxu0
    %v381 = vadd.f32 %v313, %v380
    %v382 = vpop.f32.mrb[0].mxu0
    %383 = vdwg.mxu0
    %v384 = vtanh.pop %v381
    %v385 = vld [vmem:[#allocation5 + $0x360] sm:$0xff]
    %v386 = vld [vmem:[#allocation5 + $0x378] sm:$0xff]
    %v387 = vld [vmem:[#allocation5 + $0x390] sm:$0xff]
    %v388 = vld [vmem:[#allocation5 + $0x3a8] sm:$0xff]
    %v389 = vld [vmem:[#allocation5 + $0x3c0] sm:$0xff]
    %v390 = vld [vmem:[#allocation5 + $0x3d8] sm:$0xff]
    %v391 = vld [vmem:[#allocation5 + $0x3f0] sm:$0xff]
    %v392 = vld [vmem:[#allocation5 + $0x408] sm:$0xff]
    %v393 = vld [vmem:[#allocation5 + $0x420] sm:$0xff]
    %v394 = vld [vmem:[#allocation5 + $0x438] sm:$0xff]
    %v395 = vld [vmem:[#allocation5 + $0x450] sm:$0xff]
    %v396 = vld [vmem:[#allocation5 + $0x468] sm:$0xff]
    %v397 = vld [vmem:[#allocation5 + $0x480] sm:$0xff]
    %v398 = vld [vmem:[#allocation5 + $0x498] sm:$0xff]
    %v399 = vld [vmem:[#allocation5 + $0x4b0] sm:$0xff]
    %v400 = vld [vmem:[#allocation5 + $0x4c8] sm:$0xff]
    %v401 = vlaneseq
    %v402 = vshrl.u32 %v401, 7
    %v403 = vsub.s32 3, %v402
    %v404 = vrot.slane %v196, %v403
    %405 = vmatprep.subr.mxu0 0.0
    %406 = vmatpush1.msra.mxu0 %v385
    %407 = vmatprep.subr.mxu0 0.0
    %408 = vmatpush1.msra.mxu0 %v386
    %409 = vmatprep.subr.mxu0 0.0
    %410 = vmatpush1.msra.mxu0 %v387
    %411 = vmatprep.subr.mxu0 0.0
    %412 = vmatpush1.msra.mxu0 %v388
    %413 = vmatprep.subr.mxu0 0.0
    %414 = vmatpush1.msra.mxu0 %v389
    %415 = vmatprep.subr.mxu0 0.0
    %416 = vmatpush1.msra.mxu0 %v390
    %417 = vmatprep.subr.mxu0 0.0
    %418 = vmatpush1.msra.mxu0 %v391
    %419 = vmatprep.subr.mxu0 0.0
    %420 = vmatpush1.msra.mxu0 %v392
    %421 = vmatprep.subr.mxu0 0.0
    %422 = vmatpush1.msra.mxu0 %v393
    %423 = vmatprep.subr.mxu0 0.0
    %424 = vmatpush1.msra.mxu0 %v394
    %425 = vmatprep.subr.mxu0 0.0
    %426 = vmatpush1.msra.mxu0 %v395
    %427 = vmatprep.subr.mxu0 0.0
    %428 = vmatpush1.msra.mxu0 %v396
    %429 = vmatprep.subr.mxu0 0.0
    %430 = vmatpush1.msra.mxu0 %v397
    %431 = vmatprep.subr.mxu0 0.0
    %432 = vmatpush1.msra.mxu0 %v398
    %433 = vmatprep.subr.mxu0 0.0
    %434 = vmatpush1.msra.mxu0 %v399
    %435 = vmatprep.subr.mxu0 0.0
    %436 = vmatpush1.msra.mxu0 %v400
    %437 = vmatprep.subr.mxu0 0.0
    %438 = vmatpush1.msra.mxu0 0.0
    %439 = vmatprep.subr.mxu0 0.0
    %440 = vmatpush1.msra.mxu0 0.0
    %441 = vmatprep.subr.mxu0 0.0
    %442 = vmatpush1.msra.mxu0 0.0
    %443 = vmatprep.subr.mxu0 0.0
    %444 = vmatpush1.msra.mxu0 0.0
    %445 = vmatprep.subr.mxu0 0.0
    %446 = vmatpush1.msra.mxu0 0.0
    %447 = vmatprep.subr.mxu0 0.0
    %448 = vmatpush1.msra.mxu0 0.0
    %449 = vmatprep.subr.mxu0 0.0
    %450 = vmatpush1.msra.mxu0 0.0
    %451 = vmatprep.subr.mxu0 0.0
    %452 = vmatpush1.msra.mxu0 0.0
    %453 = vmatprep.subr.mxu0 0.0
    %454 = vmatpush1.msra.mxu0 0.0
    %455 = vmatprep.subr.mxu0 0.0
    %456 = vmatpush1.msra.mxu0 0.0
    %457 = vmatprep.subr.mxu0 0.0
    %458 = vmatpush1.msra.mxu0 0.0
    %459 = vmatprep.subr.mxu0 0.0
    %460 = vmatpush1.msra.mxu0 0.0
    %461 = vmatprep.subr.mxu0 0.0
    %462 = vmatpush1.msra.mxu0 0.0
    %463 = vmatprep.subr.mxu0 0.0
    %464 = vmatpush1.msra.mxu0 0.0
    %465 = vmatprep.subr.mxu0 0.0
    %466 = vmatpush1.msra.mxu0 0.0
    %467 = vmatprep.subr.mxu0 0.0
    %468 = vmatpush1.msra.mxu0 0.0
    %469 = vmatprep.mubr.f32.mxu0 0.0
    %470 = vmatmul.mubr.f32.gmra.mrb[0].mxu0 %v384
    %v471 = vpop.f32.mrb[0].mxu0
    %v472 = vadd.f32 %v404, %v471
    %v473 = vpop.f32.mrb[0].mxu0
    %474 = vdwg.mxu0
    %v475 = vadd.f32 %v472, %v124
    %v476 = vtanh.pop %v475
    %v477 = vadd.f32 %v476, %v193
    %478 = vst [vmem:[#allocation7] sm:$0xff] %v477
    // Predicated region
    $region18: #{tpu_custom_call.1} parent=1 // pred_check
      _
    $region19: #{tpu_custom_call.1} parent=1 // pred_check_branch
      %480 = sbr.rel (0) target = $region21
    $region20: #{tpu_custom_call.1} parent=1 // pred_region
      %s482 = ssub.s32 128, 128
      %483 = vsyncadd [#allocation4], %s482
      %s485 = sshll.u32 [#allocation7], 4
      %s486 = int_to_ptr.vmem [resolvable:$true] %s485
      %488 = dma.vmem_to_hbm [thread:$0]  %s486, 128, %s2, [#allocation4]
    $region21: #{tpu_custom_call.1} parent=1 // pred_fallthru
      _
    // Predicated region
    $region22: #{tpu_custom_call.1} parent=1 // pred_check
      _
    $region23: #{tpu_custom_call.1} parent=1 // pred_check_branch
      %490 = sbr.rel (0) target = $region25
    $region24: #{tpu_custom_call.1} parent=1 // pred_region
      %491 = dma.done [#allocation4], 128
    $region25: #{tpu_custom_call.1} parent=1 // pred_fallthru
      _
    %492 = vsyncpa [#allocation3], 1
    %493 = vsyncpa [#allocation6], 1
    %494 = vsyncpa [#allocation4], 1

</llo_original>
